<compile_context>
chip_gen: v5e
topology: v5e:2x2
jax: 0.10.0
libtpu: 0.0.40
codegen_flags: <defaults>
</compile_context>

<pallas_src>
from functools import partial

import jax
import jax.numpy as jnp
from jax.experimental import pallas as pl
from jax.experimental.pallas import tpu as pltpu

EPS = 1e-12
OUT_DIM = 768  # decoder output dim is hard-coded to 768 in the PyTorch module


def _mfm_kernel(x_ref, w1_ref, b1_ref, w2_ref, b2_ref, o_ref, *,
                approximate_gelu):
    # ---- dense: Linear(D, D); MXU matmul, f32 accumulation ----------------
    h = jnp.dot(x_ref[...], w1_ref[...], preferred_element_type=jnp.float32)
    h = h + b1_ref[...].astype(jnp.float32)                  # (tm, D) + (1, D)

    if approximate_gelu:
        # tanh GELU: transcendental goes to the EUP slot (VALU relief).
        h = jax.nn.gelu(h, approximate=True)
    else:
        # exact (erf) GELU — matches ACT2FN['gelu']
        inv_sqrt2 = jnp.float32(0.7071067811865475)
        h = 0.5 * h * (1.0 + jax.lax.erf(h * inv_sqrt2))

    # ---- LayerNorm(D, eps=1e-12): fused single-pass statistics ------------
    # (affine gamma/beta already folded into W2'/b2' in the wrapper)
    d = h.shape[-1]
    inv_d = jnp.float32(1.0 / d)
    s = jnp.sum(h, axis=-1, keepdims=True)
    s2 = jnp.sum(h * h, axis=-1, keepdims=True)
    mu = s * inv_d
    var = jnp.maximum(s2 * inv_d - mu * mu, 0.0)
    hn = (h - mu) * jax.lax.rsqrt(var + EPS)

    # ---- decoder: Linear(D, 768, bias=False) + tied bias (folded affine) --
    out = jnp.dot(hn.astype(w2_ref.dtype), w2_ref[...],
                  preferred_element_type=jnp.float32)
    out = out + b2_ref[...].astype(jnp.float32)

    o_ref[...] = out.astype(o_ref.dtype)

    # TODO(synk): interleave 2-4 row sub-chunks (matmul1(j+1) vs GELU/LN/
    # matmul2(j)) so the MXU and VPU run concurrently in the compute-bound
    # regime (v5e always, v6e/v7x at large D).


def _round_up(v, m):
    return -(-v // m) * m


def mfm_block(x, params, *, tm=1024, matmul_dtype=jnp.bfloat16,
              out_dtype=None, approximate_gelu=False):
    """x: (B, S, D) float32.  params: dict of f32 weights (see init_params).

    matmul_dtype: dtype fed to the MXU for the two matmuls (bf16 default for
      v6e/v7x peak throughput; pass jnp.float32 for strict fp32 parity).
    out_dtype: output dtype (default: x.dtype).  bf16 halves the dominant
      per-step HBM stream on mem-bound shapes.
    approximate_gelu: use tanh GELU (EUP) instead of exact erf (VPU poly).
    """
    B, S, D = x.shape
    M = B * S
    out_dtype = x.dtype if out_dtype is None else out_dtype

    # ---- row-tile selection ------------------------------------------------
    # Keep tm a multiple of 256 (MXU-native / bf16-packed) when possible, and
    # target >= 8 grid steps (>= 4 per TensorCore on v7x) so the x-tile DMA-in
    # and the (tm, 768) write-back stay hidden behind compute.
    MIN_STEPS = 8
    tm = min(tm, _round_up(M, 16))
    if M >= MIN_STEPS * 256:
        tm = min(tm, max(256, (M // MIN_STEPS) // 256 * 256))
    if tm >= 256:
        tm = (tm // 256) * 256
    else:
        tm = max(16, (tm // 16) * 16)

    n_blocks = pl.cdiv(M, tm)
    M_pad = n_blocks * tm

    x2 = x.reshape(M, D)
    if M_pad != M:
        x2 = jnp.pad(x2, ((0, M_pad - M), (0, 0)))

    # ---- parameter prep (wrapper-side, one-time) ---------------------------
    # Cast MXU operands (x, W1, W2') -> halves DMA/VMEM footprint in bf16.
    # Fold LayerNorm affine into the decoder: W2' = diag(gamma) @ W2,
    # b2' = beta @ W2 + b2 (tied decoder bias).
    x2 = x2.astype(matmul_dtype)
    w1 = params["w1"].astype(matmul_dtype)
    b1 = params["b1"].astype(jnp.float32)
    gamma = params["gamma"].astype(jnp.float32)       # (1, D)
    beta = params["beta"].astype(jnp.float32)         # (1, D)
    w2f = params["w2"].astype(jnp.float32)             # (D, OUT_DIM)
    w2 = (gamma.reshape(D, 1) * w2f).astype(matmul_dtype)
    b2 = (beta @ w2f + params["b2"].astype(jnp.float32))   # (1, OUT_DIM)

    mm_bytes = jnp.dtype(matmul_dtype).itemsize
    out_bytes = jnp.dtype(out_dtype).itemsize

    # VMEM budget: single-buffered resident weights/biases, double-buffered
    # x and output tiles, plus f32 intermediates (h/hn/out) and compiler
    # scratch headroom.  Capped at ~90% of the device's physical VMEM.
    vmem_need = (mm_bytes * (D * D + D * OUT_DIM)          # W1, W2' (1 buffer)
                 + 4 * (D + OUT_DIM)                       # b1, b2' (1 buffer)
                 + 2 * mm_bytes * tm * D                   # x tile (2 buffers)
                 + 2 * out_bytes * tm * OUT_DIM            # out tile (2 buffers)
                 + 4 * tm * (2 * D + OUT_DIM)              # f32 intermediates
                 + (8 << 20))                              # headroom
    try:
        vmem_cap = int(pltpu.get_tpu_info().vmem_capacity_bytes * 0.9)
    except Exception:
        vmem_cap = 64 << 20
    vmem_limit = int(min(vmem_need, vmem_cap))

    cost = pl.CostEstimate(
        flops=2 * M_pad * D * (D + OUT_DIM) + 12 * M_pad * D,
        transcendentals=M_pad * D,  # erf / tanh
        bytes_accessed=(M_pad * D * mm_bytes
                        + (D * D + D * OUT_DIM) * mm_bytes
                        + (D + OUT_DIM) * 4
                        + M_pad * OUT_DIM * out_bytes),
    )

    # Grid-invariant operands: fetch once, single buffer (saves VMEM).
    const = dict(pipeline_mode=pl.Buffered(1))

    out = pl.pallas_call(
        partial(_mfm_kernel, approximate_gelu=approximate_gelu),
        out_shape=jax.ShapeDtypeStruct((M_pad, OUT_DIM), out_dtype),
        grid_spec=pltpu.PrefetchScalarGridSpec(
            num_scalar_prefetch=0,
            grid=(n_blocks,),
            in_specs=[
                pl.BlockSpec((tm, D), lambda i: (i, 0)),                # x tile
                pl.BlockSpec((D, D), lambda i: (0, 0), **const),        # W1
                pl.BlockSpec((1, D), lambda i: (0, 0), **const),        # b1
                pl.BlockSpec((D, OUT_DIM), lambda i: (0, 0), **const),  # W2'
                pl.BlockSpec((1, OUT_DIM), lambda i: (0, 0), **const),  # b2'
            ],
            out_specs=pl.BlockSpec((tm, OUT_DIM), lambda i: (i, 0)),
        ),
        compiler_params=pltpu.CompilerParams(
            dimension_semantics=("parallel",),
            vmem_limit_bytes=vmem_limit,
        ),
        cost_estimate=cost,
    )(x2, w1, b1, w2, b2)

    # TODO(synk): for D >= ~4k (v7x, 64 MiB VMEM) add an N-tile axis over the
    # 768 decoder outputs and a K-tile 'arbitrary' axis with a pl.when
    # accumulator for W1 instead of keeping full weights resident.

    return out[:M].reshape(B, S, OUT_DIM)


def init_params(key, embed_dim):
    """Deterministic synthetic init matching the PyTorch module's shapes.

    LayerNorm gamma/beta are given non-trivial values so the affine-fold into
    the decoder weights is actually exercised (trained LN params are not 1/0).
    """
    k1, k2, k3, k4, k5 = jax.random.split(key, 5)
    scale1 = 1.0 / jnp.sqrt(embed_dim)
    return {
        # nn.Linear(embed_dim, embed_dim): stored as (in, out)
        "w1": jax.random.uniform(k1, (embed_dim, embed_dim), jnp.float32,
                                 -scale1, scale1),
        "b1": jax.random.uniform(k2, (1, embed_dim), jnp.float32,
                                 -scale1, scale1),
        # nn.LayerNorm(embed_dim)
        "gamma": 1.0 + 0.25 * jax.random.normal(k4, (1, embed_dim), jnp.float32),
        "beta": 0.1 * jax.random.normal(k5, (1, embed_dim), jnp.float32),
        # nn.Linear(embed_dim, 768, bias=False): stored as (in, out)
        "w2": jax.random.uniform(k3, (embed_dim, OUT_DIM), jnp.float32,
                                 -scale1, scale1),
        # self.bias = nn.Parameter(torch.zeros(768)) tied to decoder.bias
        "b2": jnp.zeros((1, OUT_DIM), jnp.float32),
    }


def _reference(x, params):
    """Pure-JAX f32 reference mirroring the PyTorch forward."""
    h = x @ params["w1"] + params["b1"][0]
    h = 0.5 * h * (1.0 + jax.lax.erf(h / jnp.sqrt(2.0)))
    mu = jnp.mean(h, axis=-1, keepdims=True)
    var = jnp.mean((h - mu) ** 2, axis=-1, keepdims=True)
    h = (h - mu) / jnp.sqrt(var + EPS)
    h = h * params["gamma"][0] + params["beta"][0]
    return h @ params["w2"] + params["b2"][0]


if __name__ == "__main__":
    B, S, D = 2, 8, 256  # small demo shapes; embed_dim=256, decoder out = 768
    key = jax.random.PRNGKey(0)
    kx, kp = jax.random.split(key)

    x = jax.random.normal(kx, (B, S, D), jnp.float32)
    params = init_params(kp, D)
    ref = _reference(x, params)

    # Strict-parity f32 path (exact erf GELU, f32 MXU inputs).
    out_f32 = jax.block_until_ready(mfm_block(x, params, matmul_dtype=jnp.float32))
    assert out_f32.shape == (B, S, OUT_DIM), out_f32.shape
    assert jnp.allclose(out_f32, ref, atol=5e-4, rtol=5e-4), float(
        jnp.max(jnp.abs(out_f32 - ref)))

    # Fast bf16-MXU path (default); looser tolerance from bf16 matmul inputs.
    out_bf16 = jax.block_until_ready(mfm_block(x, params))
    assert out_bf16.shape == (B, S, OUT_DIM), out_bf16.shape
    assert jnp.allclose(out_bf16, ref, atol=5e-2, rtol=5e-2), float(
        jnp.max(jnp.abs(out_bf16 - ref)))

    # Fast path with tanh-approximate GELU (VALU relief; v5e win).
    out_fast = jax.block_until_ready(
        mfm_block(x, params, approximate_gelu=True))
    assert out_fast.shape == (B, S, OUT_DIM), out_fast.shape
    assert jnp.allclose(out_fast, ref, atol=5e-2, rtol=5e-2), float(
        jnp.max(jnp.abs(out_fast - ref)))

    print("KERNEL_OK")
</pallas_src>

<mosaic_0001>
module attributes {stable_mosaic.version = 11 : i64} {
  func.func @_mfm_kernel(%arg0: i32, %arg1: memref<16x256xf32, #tpu.memory_space<vmem>>, %arg2: memref<256x256xf32, #tpu.memory_space<vmem>>, %arg3: memref<1x256xf32, #tpu.memory_space<vmem>>, %arg4: memref<256x768xf32, #tpu.memory_space<vmem>>, %arg5: memref<1x768xf32, #tpu.memory_space<vmem>>, %arg6: memref<16x768xf32, #tpu.memory_space<vmem>>) attributes {dimension_semantics = [#tpu.dimension_semantics<parallel>], iteration_bounds = array<i64: 1>, scalar_prefetch = 0 : i64, scratch_operands = 0 : i64, tpu.core_type = #tpu.core_type<tc>, window_params = [{transform_indices = @transform_0, window_bounds = array<i64: 16, 256>}, {pipeline_mode = #tpu.pipeline_mode<synchronous>, transform_indices = @transform_1, window_bounds = array<i64: 256, 256>}, {pipeline_mode = #tpu.pipeline_mode<synchronous>, transform_indices = @transform_2, window_bounds = array<i64: 1, 256>}, {pipeline_mode = #tpu.pipeline_mode<synchronous>, transform_indices = @transform_3, window_bounds = array<i64: 256, 768>}, {pipeline_mode = #tpu.pipeline_mode<synchronous>, transform_indices = @transform_4, window_bounds = array<i64: 1, 768>}, {transform_indices = @transform_5, window_bounds = array<i64: 16, 768>}]} {
    %c0 = arith.constant 0 : index
    %c0_0 = arith.constant 0 : index
    %0 = vector.load %arg1[%c0, %c0_0] : memref<16x256xf32, #tpu.memory_space<vmem>>, vector<16x256xf32>
    %c0_1 = arith.constant 0 : index
    %c0_2 = arith.constant 0 : index
    %1 = vector.load %arg2[%c0_1, %c0_2] : memref<256x256xf32, #tpu.memory_space<vmem>>, vector<256x256xf32>
    %cst = arith.constant dense<0.000000e+00> : vector<16x256xf32>
    %2 = tpu.matmul %0, %1, %cst {dimension_numbers = #tpu.dot_dimension_numbers<[1], [0], [0], [1], [0, 0, 1, 1], [], []>} : vector<16x256xf32>, vector<256x256xf32>, vector<16x256xf32> -> vector<16x256xf32>
    %c0_3 = arith.constant 0 : index
    %c0_4 = arith.constant 0 : index
    %3 = vector.load %arg3[%c0_3, %c0_4] : memref<1x256xf32, #tpu.memory_space<vmem>>, vector<1x256xf32>
    %4 = vector.broadcast %3 : vector<1x256xf32> to vector<16x256xf32>
    %5 = arith.addf %2, %4 : vector<16x256xf32>
    %cst_5 = arith.constant 5.000000e-01 : f32
    %6 = vector.broadcast %cst_5 : f32 to vector<16x256xf32>
    %7 = arith.mulf %6, %5 : vector<16x256xf32>
    %cst_6 = arith.constant 0.707106769 : f32
    %8 = vector.broadcast %cst_6 : f32 to vector<16x256xf32>
    %9 = arith.mulf %5, %8 : vector<16x256xf32>
    %10 = math.erf %9 : vector<16x256xf32>
    %cst_7 = arith.constant 1.000000e+00 : f32
    %11 = vector.broadcast %cst_7 : f32 to vector<16x256xf32>
    %12 = arith.addf %11, %10 : vector<16x256xf32>
    %13 = arith.mulf %7, %12 : vector<16x256xf32>
    %cst_8 = arith.constant dense<0.000000e+00> : vector<16xf32>
    %14 = vector.multi_reduction <add>, %13, %cst_8 [1] : vector<16x256xf32> to vector<16xf32>
    %15 = vector.shape_cast %14 : vector<16xf32> to vector<16x1xf32>
    %16 = arith.mulf %13, %13 : vector<16x256xf32>
    %cst_9 = arith.constant dense<0.000000e+00> : vector<16xf32>
    %17 = vector.multi_reduction <add>, %16, %cst_9 [1] : vector<16x256xf32> to vector<16xf32>
    %18 = vector.shape_cast %17 : vector<16xf32> to vector<16x1xf32>
    %cst_10 = arith.constant 3.906250e-03 : f32
    %19 = vector.broadcast %cst_10 : f32 to vector<16x1xf32>
    %20 = arith.mulf %15, %19 : vector<16x1xf32>
    %cst_11 = arith.constant 3.906250e-03 : f32
    %21 = vector.broadcast %cst_11 : f32 to vector<16x1xf32>
    %22 = arith.mulf %18, %21 : vector<16x1xf32>
    %23 = arith.mulf %20, %20 : vector<16x1xf32>
    %24 = arith.subf %22, %23 : vector<16x1xf32>
    %cst_12 = arith.constant 0.000000e+00 : f32
    %25 = vector.broadcast %cst_12 : f32 to vector<16x1xf32>
    %26 = arith.maximumf %24, %25 : vector<16x1xf32>
    %27 = vector.broadcast %20 : vector<16x1xf32> to vector<16x256xf32>
    %28 = arith.subf %13, %27 : vector<16x256xf32>
    %cst_13 = arith.constant 9.99999996E-13 : f32
    %29 = vector.broadcast %cst_13 : f32 to vector<16x1xf32>
    %30 = arith.addf %26, %29 : vector<16x1xf32>
    %31 = math.rsqrt %30 : vector<16x1xf32>
    %32 = vector.broadcast %31 : vector<16x1xf32> to vector<16x256xf32>
    %33 = arith.mulf %28, %32 : vector<16x256xf32>
    %c0_14 = arith.constant 0 : index
    %c0_15 = arith.constant 0 : index
    %34 = vector.load %arg4[%c0_14, %c0_15] : memref<256x768xf32, #tpu.memory_space<vmem>>, vector<256x768xf32>
    %cst_16 = arith.constant dense<0.000000e+00> : vector<16x768xf32>
    %35 = tpu.matmul %33, %34, %cst_16 {dimension_numbers = #tpu.dot_dimension_numbers<[1], [0], [0], [1], [0, 0, 1, 1], [], []>} : vector<16x256xf32>, vector<256x768xf32>, vector<16x768xf32> -> vector<16x768xf32>
    %c0_17 = arith.constant 0 : index
    %c0_18 = arith.constant 0 : index
    %36 = vector.load %arg5[%c0_17, %c0_18] : memref<1x768xf32, #tpu.memory_space<vmem>>, vector<1x768xf32>
    %37 = vector.broadcast %36 : vector<1x768xf32> to vector<16x768xf32>
    %38 = arith.addf %35, %37 : vector<16x768xf32>
    %c0_19 = arith.constant 0 : index
    %c0_20 = arith.constant 0 : index
    %39 = vector.load %arg6[%c0_19, %c0_20] : memref<16x768xf32, #tpu.memory_space<vmem>>, vector<16x768xf32>
    tpu.vector_store %arg6[%c0_19, %c0_20], %38 {strides = array<i32>} : memref<16x768xf32, #tpu.memory_space<vmem>>, vector<16x768xf32>,
    return
  }
  func.func @transform_0(%arg0: i32) -> (i32, i32) {
    %c0_i32 = arith.constant 0 : i32
    %c0_i32_0 = arith.constant 0 : i32
    return %arg0, %c0_i32 : i32, i32
  }
  func.func @transform_1(%arg0: i32) -> (i32, i32) {
    %c0_i32 = arith.constant 0 : i32
    %c0_i32_0 = arith.constant 0 : i32
    %c0_i32_1 = arith.constant 0 : i32
    return %c0_i32, %c0_i32_0 : i32, i32
  }
  func.func @transform_2(%arg0: i32) -> (i32, i32) {
    %c0_i32 = arith.constant 0 : i32
    %c0_i32_0 = arith.constant 0 : i32
    %c0_i32_1 = arith.constant 0 : i32
    return %c0_i32, %c0_i32_0 : i32, i32
  }
  func.func @transform_3(%arg0: i32) -> (i32, i32) {
    %c0_i32 = arith.constant 0 : i32
    %c0_i32_0 = arith.constant 0 : i32
    %c0_i32_1 = arith.constant 0 : i32
    return %c0_i32, %c0_i32_0 : i32, i32
  }
  func.func @transform_4(%arg0: i32) -> (i32, i32) {
    %c0_i32 = arith.constant 0 : i32
    %c0_i32_0 = arith.constant 0 : i32
    %c0_i32_1 = arith.constant 0 : i32
    return %c0_i32, %c0_i32_0 : i32, i32
  }
  func.func @transform_5(%arg0: i32) -> (i32, i32) {
    %c0_i32 = arith.constant 0 : i32
    %c0_i32_0 = arith.constant 0 : i32
    return %arg0, %c0_i32 : i32, i32
  }
}

</mosaic_0001>

<llo_original>
// kernel: tpu_custom_call.1
$region0: #{tpu_custom_call.1}
  #allocation0 [shape = 'u32[]', space=smem, size = 0x4, offset = 0x4, fixed_abs, tag = 'smem constant byte address 0x4 - core index']
  #allocation1 [shape = 'u32[72,128]{1,0:T(1,128)}', space=vmem, size = 0x9000, scoped, tag = 'internal scratch']
  %s0 = inlined_call_operand.hbm [shape: f32[16,256], index: 0, kind: input, shape index: {}]
  %s1 = inlined_call_operand.hbm [shape: f32[256,256], index: 1, kind: input, shape index: {}]
  %s2 = inlined_call_operand.hbm [shape: f32[1,256], index: 2, kind: input, shape index: {}]
  %s3 = inlined_call_operand.hbm [shape: f32[256,768], index: 3, kind: input, shape index: {}]
  %s4 = inlined_call_operand.hbm [shape: f32[1,768], index: 4, kind: input, shape index: {}]
  %s5 = inlined_call_operand.hbm [shape: f32[16,768], index: 5, kind: output, shape index: {}]
  %s6 = sld [smem:[#allocation0]]
  $region50: #{tpu_custom_call.1} parent=0
    _
  %s8 = ssub.s32 1, %s6
  %s9 = scalar_select 0, %s8, %s6
  $region1: #{tpu_custom_call.1} parent=0
    #allocation2 [shape = 'u8[16384]{0}', space=vmem, size = 0x4000, scoped, tag = 'input window, operand 0, single buffered']
    #allocation3 [shape = 's32[1]{0}', space=sflag, size = 0x4, scoped, tag = 'scoped memory for tpu_custom_call.1']
    #allocation4 [shape = 's32[1]{0}', space=sflag, size = 0x4, scoped, tag = 'scoped memory for tpu_custom_call.1']
    #allocation5 [shape = 'u8[262144]{0}', space=vmem, size = 0x40000, scoped, tag = 'input window, operand 1, single buffered']
    #allocation6 [shape = 's32[1]{0}', space=sflag, size = 0x4, scoped, tag = 'scoped memory for tpu_custom_call.1']
    #allocation7 [shape = 'u8[1024]{0}', space=vmem, size = 0x400, scoped, tag = 'input window, operand 2, single buffered']
    #allocation8 [shape = 'u8[786432]{0}', space=vmem, size = 0xc0000, scoped, tag = 'input window, operand 3, single buffered']
    #allocation9 [shape = 's32[1]{0}', space=sflag, size = 0x4, scoped, tag = 'scoped memory for tpu_custom_call.1']
    #allocation10 [shape = 'u8[3072]{0}', space=vmem, size = 0xc00, scoped, tag = 'input window, operand 4, single buffered']
    #allocation11 [shape = 'u8[49152]{0}', space=vmem, size = 0xc000, scoped, tag = 'output window, operand 0, single buffered']
    %10 = vsyncpa [#allocation3], 0
    %11 = vsyncpa [#allocation6], 0
    %12 = vsyncpa [#allocation9], 0
    %13 = vsyncpa [#allocation4], 0
    // Predicated region
    $region2: #{tpu_custom_call.1} parent=1 // pred_check
      _
    $region3: #{tpu_custom_call.1} parent=1 // pred_check_branch
      %15 = sbr.rel (0) target = $region5
    $region4: #{tpu_custom_call.1} parent=1 // pred_region
      %17 = vsyncadd [#allocation3], 0
      %s18 = sshll.u32 %s0, 4
      %s19 = int_to_ptr.hbm [resolvable:$true] %s18
      %s20 = sshll.u32 [#allocation2], 4
      %s21 = int_to_ptr.vmem [resolvable:$true] %s20
      %26 = dma.hbm_to_vmem [thread:$0]  %s19, 512, %s21, [#allocation3], 256, 256, 16
    $region5: #{tpu_custom_call.1} parent=1 // pred_fallthru
      _
    // Predicated region
    $region6: #{tpu_custom_call.1} parent=1 // pred_check
      _
    $region7: #{tpu_custom_call.1} parent=1 // pred_check_branch
      %28 = sbr.rel (0) target = $region9
    $region8: #{tpu_custom_call.1} parent=1 // pred_region
      %30 = vsyncadd [#allocation6], 0
      %s31 = sshll.u32 %s1, 4
      %s32 = int_to_ptr.hbm [resolvable:$true] %s31
      %s33 = sshll.u32 [#allocation5], 4
      %s34 = int_to_ptr.vmem [resolvable:$true] %s33
      %39 = dma.hbm_to_vmem [thread:$0]  %s32, 8192, %s34, [#allocation6], 256, 256, 16
    $region9: #{tpu_custom_call.1} parent=1 // pred_fallthru
      _
    // Predicated region
    $region10: #{tpu_custom_call.1} parent=1 // pred_check
      _
    $region11: #{tpu_custom_call.1} parent=1 // pred_check_branch
      %41 = sbr.rel (0) target = $region13
    $region12: #{tpu_custom_call.1} parent=1 // pred_region
      %43 = vsyncadd [#allocation6], 0
      %s45 = sshll.u32 %s2, 4
      %s46 = int_to_ptr.hbm [resolvable:$true] %s45
      %s47 = sshll.u32 [#allocation7], 4
      %s48 = int_to_ptr.vmem [resolvable:$true] %s47
      %50 = dma.hbm_to_vmem [thread:$0]  %s46, 32, %s48, [#allocation6]
    $region13: #{tpu_custom_call.1} parent=1 // pred_fallthru
      _
    // Predicated region
    $region14: #{tpu_custom_call.1} parent=1 // pred_check
      _
    $region15: #{tpu_custom_call.1} parent=1 // pred_check_branch
      %52 = sbr.rel (0) target = $region17
    $region16: #{tpu_custom_call.1} parent=1 // pred_region
      %54 = vsyncadd [#allocation9], 0
      %s55 = sshll.u32 %s3, 4
      %s56 = int_to_ptr.hbm [resolvable:$true] %s55
      %s57 = sshll.u32 [#allocation8], 4
      %s58 = int_to_ptr.vmem [resolvable:$true] %s57
      %63 = dma.hbm_to_vmem [thread:$0]  %s56, 24576, %s58, [#allocation9], 768, 768, 48
    $region17: #{tpu_custom_call.1} parent=1 // pred_fallthru
      _
    // Predicated region
    $region18: #{tpu_custom_call.1} parent=1 // pred_check
      _
    $region19: #{tpu_custom_call.1} parent=1 // pred_check_branch
      %65 = sbr.rel (0) target = $region21
    $region20: #{tpu_custom_call.1} parent=1 // pred_region
      %67 = vsyncadd [#allocation9], 0
      %s69 = sshll.u32 %s4, 4
      %s70 = int_to_ptr.hbm [resolvable:$true] %s69
      %s71 = sshll.u32 [#allocation10], 4
      %s72 = int_to_ptr.vmem [resolvable:$true] %s71
      %74 = dma.hbm_to_vmem [thread:$0]  %s70, 96, %s72, [#allocation9]
    $region21: #{tpu_custom_call.1} parent=1 // pred_fallthru
      _
    // Predicated region
    $region22: #{tpu_custom_call.1} parent=1 // pred_check
      _
    $region23: #{tpu_custom_call.1} parent=1 // pred_check_branch
      %76 = sbr.rel (0) target = $region25
    $region24: #{tpu_custom_call.1} parent=1 // pred_region
      %78 = dma.done [#allocation3], 512
    $region25: #{tpu_custom_call.1} parent=1 // pred_fallthru
      _
    // Predicated region
    $region26: #{tpu_custom_call.1} parent=1 // pred_check
      _
    $region27: #{tpu_custom_call.1} parent=1 // pred_check_branch
      %80 = sbr.rel (0) target = $region29
    $region28: #{tpu_custom_call.1} parent=1 // pred_region
      %82 = dma.done [#allocation6], 8192
    $region29: #{tpu_custom_call.1} parent=1 // pred_fallthru
      _
    // Predicated region
    $region30: #{tpu_custom_call.1} parent=1 // pred_check
      _
    $region31: #{tpu_custom_call.1} parent=1 // pred_check_branch
      %84 = sbr.rel (0) target = $region33
    $region32: #{tpu_custom_call.1} parent=1 // pred_region
      %86 = dma.done [#allocation6], 32
    $region33: #{tpu_custom_call.1} parent=1 // pred_fallthru
      _
    // Predicated region
    $region34: #{tpu_custom_call.1} parent=1 // pred_check
      _
    $region35: #{tpu_custom_call.1} parent=1 // pred_check_branch
      %88 = sbr.rel (0) target = $region37
    $region36: #{tpu_custom_call.1} parent=1 // pred_region
      %90 = dma.done [#allocation9], 24576
    $region37: #{tpu_custom_call.1} parent=1 // pred_fallthru
      _
    // Predicated region
    $region38: #{tpu_custom_call.1} parent=1 // pred_check
      _
    $region39: #{tpu_custom_call.1} parent=1 // pred_check_branch
      %92 = sbr.rel (0) target = $region41
    $region40: #{tpu_custom_call.1} parent=1 // pred_region
      %94 = dma.done [#allocation9], 96
    $region41: #{tpu_custom_call.1} parent=1 // pred_fallthru
      _
    %v95 = vld [vmem:[#allocation2] sm:$0xff]
    %v96 = vld [vmem:[#allocation2 + $0x8] sm:$0xff]
    %v97 = vld [vmem:[#allocation2 + $0x10] sm:$0xff]
    %v98 = vld [vmem:[#allocation2 + $0x18] sm:$0xff]
    %v99 = vld [vmem:[#allocation5] sm:$0xff]
    %v100 = vld [vmem:[#allocation5 + $0x8] sm:$0xff]
    %v101 = vld [vmem:[#allocation5 + $0x10] sm:$0xff]
    %v102 = vld [vmem:[#allocation5 + $0x18] sm:$0xff]
    %v103 = vld [vmem:[#allocation5 + $0x20] sm:$0xff]
    %v104 = vld [vmem:[#allocation5 + $0x28] sm:$0xff]
    %v105 = vld [vmem:[#allocation5 + $0x30] sm:$0xff]
    %v106 = vld [vmem:[#allocation5 + $0x38] sm:$0xff]
    %v107 = vld [vmem:[#allocation5 + $0x40] sm:$0xff]
    %v108 = vld [vmem:[#allocation5 + $0x48] sm:$0xff]
    %v109 = vld [vmem:[#allocation5 + $0x50] sm:$0xff]
    %v110 = vld [vmem:[#allocation5 + $0x58] sm:$0xff]
    %v111 = vld [vmem:[#allocation5 + $0x60] sm:$0xff]
    %v112 = vld [vmem:[#allocation5 + $0x68] sm:$0xff]
    %v113 = vld [vmem:[#allocation5 + $0x70] sm:$0xff]
    %v114 = vld [vmem:[#allocation5 + $0x78] sm:$0xff]
    %v115 = vld [vmem:[#allocation5 + $0x80] sm:$0xff]
    %v116 = vld [vmem:[#allocation5 + $0x88] sm:$0xff]
    %v117 = vld [vmem:[#allocation5 + $0x90] sm:$0xff]
    %v118 = vld [vmem:[#allocation5 + $0x98] sm:$0xff]
    %v119 = vld [vmem:[#allocation5 + $0xa0] sm:$0xff]
    %v120 = vld [vmem:[#allocation5 + $0xa8] sm:$0xff]
    %v121 = vld [vmem:[#allocation5 + $0xb0] sm:$0xff]
    %v122 = vld [vmem:[#allocation5 + $0xb8] sm:$0xff]
    %v123 = vld [vmem:[#allocation5 + $0xc0] sm:$0xff]
    %v124 = vld [vmem:[#allocation5 + $0xc8] sm:$0xff]
    %v125 = vld [vmem:[#allocation5 + $0xd0] sm:$0xff]
    %v126 = vld [vmem:[#allocation5 + $0xd8] sm:$0xff]
    %v127 = vld [vmem:[#allocation5 + $0xe0] sm:$0xff]
    %v128 = vld [vmem:[#allocation5 + $0xe8] sm:$0xff]
    %v129 = vld [vmem:[#allocation5 + $0xf0] sm:$0xff]
    %v130 = vld [vmem:[#allocation5 + $0xf8] sm:$0xff]
    %v131 = vld [vmem:[#allocation5 + $0x100] sm:$0xff]
    %v132 = vld [vmem:[#allocation5 + $0x108] sm:$0xff]
    %v133 = vld [vmem:[#allocation5 + $0x110] sm:$0xff]
    %v134 = vld [vmem:[#allocation5 + $0x118] sm:$0xff]
    %v135 = vld [vmem:[#allocation5 + $0x120] sm:$0xff]
    %v136 = vld [vmem:[#allocation5 + $0x128] sm:$0xff]
    %v137 = vld [vmem:[#allocation5 + $0x130] sm:$0xff]
    %v138 = vld [vmem:[#allocation5 + $0x138] sm:$0xff]
    %v139 = vld [vmem:[#allocation5 + $0x140] sm:$0xff]
    %v140 = vld [vmem:[#allocation5 + $0x148] sm:$0xff]
    %v141 = vld [vmem:[#allocation5 + $0x150] sm:$0xff]
    %v142 = vld [vmem:[#allocation5 + $0x158] sm:$0xff]
    %v143 = vld [vmem:[#allocation5 + $0x160] sm:$0xff]
    %v144 = vld [vmem:[#allocation5 + $0x168] sm:$0xff]
    %v145 = vld [vmem:[#allocation5 + $0x170] sm:$0xff]
    %v146 = vld [vmem:[#allocation5 + $0x178] sm:$0xff]
    %v147 = vld [vmem:[#allocation5 + $0x180] sm:$0xff]
    %v148 = vld [vmem:[#allocation5 + $0x188] sm:$0xff]
    %v149 = vld [vmem:[#allocation5 + $0x190] sm:$0xff]
    %v150 = vld [vmem:[#allocation5 + $0x198] sm:$0xff]
    %v151 = vld [vmem:[#allocation5 + $0x1a0] sm:$0xff]
    %v152 = vld [vmem:[#allocation5 + $0x1a8] sm:$0xff]
    %v153 = vld [vmem:[#allocation5 + $0x1b0] sm:$0xff]
    %v154 = vld [vmem:[#allocation5 + $0x1b8] sm:$0xff]
    %v155 = vld [vmem:[#allocation5 + $0x1c0] sm:$0xff]
    %v156 = vld [vmem:[#allocation5 + $0x1c8] sm:$0xff]
    %v157 = vld [vmem:[#allocation5 + $0x1d0] sm:$0xff]
    %v158 = vld [vmem:[#allocation5 + $0x1d8] sm:$0xff]
    %v159 = vld [vmem:[#allocation5 + $0x1e0] sm:$0xff]
    %v160 = vld [vmem:[#allocation5 + $0x1e8] sm:$0xff]
    %v161 = vld [vmem:[#allocation5 + $0x1f0] sm:$0xff]
    %v162 = vld [vmem:[#allocation5 + $0x1f8] sm:$0xff]
    %v163 = vld [vmem:[#allocation7] sm:$0x3]
    %v165 = vperm.slane %v163, 0
    %v166 = vperm.slane %v163, 1
    %169 = vmatpush.msra.mxu0 %v129
    %170 = vmatpush.msra.mxu0 %v127
    %171 = vmatpush.msra.mxu0 %v125
    %172 = vmatpush.msra.mxu0 %v123
    %173 = vmatpush.msra.mxu0 %v121
    %174 = vmatpush.msra.mxu0 %v119
    %175 = vmatpush.msra.mxu0 %v117
    %176 = vmatpush.msra.mxu0 %v115
    %177 = vmatpush.msra.mxu0 %v113
    %178 = vmatpush.msra.mxu0 %v111
    %179 = vmatpush.msra.mxu0 %v109
    %180 = vmatpush.msra.mxu0 %v107
    %181 = vmatpush.msra.mxu0 %v105
    %182 = vmatpush.msra.mxu0 %v103
    %183 = vmatpush.msra.mxu0 %v101
    %184 = vmatpush.msra.mxu0 %v99
    %185 = vmatmul.f32.gmra.mxu0 %v95
    %v186 = vpop.f32.mrf.mxu0
    %v187 = vadd.f32 %v165, %v186
    %188 = vmatmul.f32.gmra.mxu0 %v97
    %v189 = vpop.f32.mrf.mxu0
    %v190 = vadd.f32 %v165, %v189
    %191 = vdwg.mxu0
    %192 = vmatpush.msra.mxu0 %v161
    %193 = vmatpush.msra.mxu0 %v159
    %194 = vmatpush.msra.mxu0 %v157
    %195 = vmatpush.msra.mxu0 %v155
    %196 = vmatpush.msra.mxu0 %v153
    %197 = vmatpush.msra.mxu0 %v151
    %198 = vmatpush.msra.mxu0 %v149
    %199 = vmatpush.msra.mxu0 %v147
    %200 = vmatpush.msra.mxu0 %v145
    %201 = vmatpush.msra.mxu0 %v143
    %202 = vmatpush.msra.mxu0 %v141
    %203 = vmatpush.msra.mxu0 %v139
    %204 = vmatpush.msra.mxu0 %v137
    %205 = vmatpush.msra.mxu0 %v135
    %206 = vmatpush.msra.mxu0 %v133
    %207 = vmatpush.msra.mxu0 %v131
    %208 = vmatmul.f32.gmra.mxu0 %v96
    %v209 = vpop.f32.mrf.mxu0
    %v210 = vadd.f32 %v187, %v209
    %211 = vmatmul.f32.gmra.mxu0 %v98
    %v212 = vpop.f32.mrf.mxu0
    %v213 = vadd.f32 %v190, %v212
    %214 = vdwg.mxu0
    %215 = vmatpush.msra.mxu0 %v130
    %216 = vmatpush.msra.mxu0 %v128
    %217 = vmatpush.msra.mxu0 %v126
    %218 = vmatpush.msra.mxu0 %v124
    %219 = vmatpush.msra.mxu0 %v122
    %220 = vmatpush.msra.mxu0 %v120
    %221 = vmatpush.msra.mxu0 %v118
    %222 = vmatpush.msra.mxu0 %v116
    %223 = vmatpush.msra.mxu0 %v114
    %224 = vmatpush.msra.mxu0 %v112
    %225 = vmatpush.msra.mxu0 %v110
    %226 = vmatpush.msra.mxu0 %v108
    %227 = vmatpush.msra.mxu0 %v106
    %228 = vmatpush.msra.mxu0 %v104
    %229 = vmatpush.msra.mxu0 %v102
    %230 = vmatpush.msra.mxu0 %v100
    %231 = vmatmul.f32.gmra.mxu0 %v95
    %v232 = vpop.f32.mrf.mxu0
    %v233 = vadd.f32 %v166, %v232
    %234 = vmatmul.f32.gmra.mxu0 %v97
    %v235 = vpop.f32.mrf.mxu0
    %v236 = vadd.f32 %v166, %v235
    %237 = vdwg.mxu0
    %238 = vmatpush.msra.mxu0 %v162
    %239 = vmatpush.msra.mxu0 %v160
    %240 = vmatpush.msra.mxu0 %v158
    %241 = vmatpush.msra.mxu0 %v156
    %242 = vmatpush.msra.mxu0 %v154
    %243 = vmatpush.msra.mxu0 %v152
    %244 = vmatpush.msra.mxu0 %v150
    %245 = vmatpush.msra.mxu0 %v148
    %246 = vmatpush.msra.mxu0 %v146
    %247 = vmatpush.msra.mxu0 %v144
    %248 = vmatpush.msra.mxu0 %v142
    %249 = vmatpush.msra.mxu0 %v140
    %250 = vmatpush.msra.mxu0 %v138
    %251 = vmatpush.msra.mxu0 %v136
    %252 = vmatpush.msra.mxu0 %v134
    %253 = vmatpush.msra.mxu0 %v132
    %254 = vmatmul.f32.gmra.mxu0 %v96
    %v255 = vpop.f32.mrf.mxu0
    %v256 = vadd.f32 %v233, %v255
    %257 = vmatmul.f32.gmra.mxu0 %v98
    %v258 = vpop.f32.mrf.mxu0
    %v259 = vadd.f32 %v236, %v258
    %260 = vdwg.mxu0
    %v261 = vmul.f32 %v210, 0.5
    %v262 = vmul.f32 %v256, 0.5
    %v263 = vmul.f32 %v213, 0.5
    %v264 = vmul.f32 %v259, 0.5
    %v265 = vmul.f32 %v210, 0.70710677
    %v266 = vmul.f32 %v256, 0.70710677
    %v267 = vmul.f32 %v213, 0.70710677
    %v268 = vmul.f32 %v259, 0.70710677
    %v269 = vmul.f32 %v265, %v265
    %v270 = vmin.f32 16.0, %v269
    %v271 = vmul.f32 %v270, 2.1237322e-06
    %v272 = vadd.f32 %v271, 0.00028619796
    %v273 = vmul.f32 %v270, %v272
    %v274 = vadd.f32 %v273, 0.0036580483
    %v275 = vmul.f32 %v270, %v274
    %v276 = vadd.f32 %v275, 0.05243302
    %v277 = vmul.f32 %v270, %v276
    %v278 = vadd.f32 %v277, 0.18741608
    %v279 = vmul.f32 %v270, %v278
    %v280 = vadd.f32 %v279, 1.1283791
    %v281 = vmul.f32 %v265, %v280
    %v282 = vmul.f32 %v270, 3.8918573e-05
    %v283 = vadd.f32 %v282, 0.001143296
    %v284 = vmul.f32 %v270, %v283
    %v285 = vadd.f32 %v284, 0.014752088
    %v286 = vmul.f32 %v270, %v285
    %v287 = vadd.f32 %v286, 0.112945676
    %v288 = vmul.f32 %v270, %v287
    %v289 = vadd.f32 %v288, 0.4994258
    %v290 = vmul.f32 %v270, %v289
    %v291 = vadd.f32 %v290, 1.0
    %v292 = vrcp.pop %v291
    %v293 = vmul.f32 %v291, %v292
    %v294 = vsub.f32 1.0, %v293
    %v295 = vmul.f32 %v292, %v294
    %v296 = vadd.f32 %v292, %v295
    %vm297 = vweird.f32 %v291
    %vm298 = vweird.f32 %v292
    %vm299 = vmor %vm297, %vm298
    %v300 = vsel %vm299, %v292, %v296
    %v301 = vand.u32 2147483647, %v291
    %vm302 = vcmp.eq.f32.partialorder %v301, 8.507059e+37
    %v303 = vand.u32 %v291, 2147483648
    %v304 = vor.u32 1.1754944e-38, %v303
    %v305 = vsel %vm302, %v304, %v300
    %v306 = vmul.f32 %v281, %v305
    %v307 = vmin.f32 %v306, 1.0
    %v308 = vmax.f32 %v307, -1.0
    %v309 = vmul.f32 %v266, %v266
    %v310 = vmin.f32 16.0, %v309
    %v311 = vmul.f32 %v310, 2.1237322e-06
    %v312 = vadd.f32 %v311, 0.00028619796
    %v313 = vmul.f32 %v310, %v312
    %v314 = vadd.f32 %v313, 0.0036580483
    %v315 = vmul.f32 %v310, %v314
    %v316 = vadd.f32 %v315, 0.05243302
    %v317 = vmul.f32 %v310, %v316
    %v318 = vadd.f32 %v317, 0.18741608
    %v319 = vmul.f32 %v310, %v318
    %v320 = vadd.f32 %v319, 1.1283791
    %v321 = vmul.f32 %v266, %v320
    %v322 = vmul.f32 %v310, 3.8918573e-05
    %v323 = vadd.f32 %v322, 0.001143296
    %v324 = vmul.f32 %v310, %v323
    %v325 = vadd.f32 %v324, 0.014752088
    %v326 = vmul.f32 %v310, %v325
    %v327 = vadd.f32 %v326, 0.112945676
    %v328 = vmul.f32 %v310, %v327
    %v329 = vadd.f32 %v328, 0.4994258
    %v330 = vmul.f32 %v310, %v329
    %v331 = vadd.f32 %v330, 1.0
    %v332 = vrcp.pop %v331
    %v333 = vmul.f32 %v331, %v332
    %v334 = vsub.f32 1.0, %v333
    %v335 = vmul.f32 %v332, %v334
    %v336 = vadd.f32 %v332, %v335
    %vm337 = vweird.f32 %v331
    %vm338 = vweird.f32 %v332
    %vm339 = vmor %vm337, %vm338
    %v340 = vsel %vm339, %v332, %v336
    %v341 = vand.u32 2147483647, %v331
    %vm342 = vcmp.eq.f32.partialorder %v341, 8.507059e+37
    %v343 = vand.u32 %v331, 2147483648
    %v344 = vor.u32 1.1754944e-38, %v343
    %v345 = vsel %vm342, %v344, %v340
    %v346 = vmul.f32 %v321, %v345
    %v347 = vmin.f32 %v346, 1.0
    %v348 = vmax.f32 %v347, -1.0
    %v349 = vmul.f32 %v267, %v267
    %v350 = vmin.f32 16.0, %v349
    %v351 = vmul.f32 %v350, 2.1237322e-06
    %v352 = vadd.f32 %v351, 0.00028619796
    %v353 = vmul.f32 %v350, %v352
    %v354 = vadd.f32 %v353, 0.0036580483
    %v355 = vmul.f32 %v350, %v354
    %v356 = vadd.f32 %v355, 0.05243302
    %v357 = vmul.f32 %v350, %v356
    %v358 = vadd.f32 %v357, 0.18741608
    %v359 = vmul.f32 %v350, %v358
    %v360 = vadd.f32 %v359, 1.1283791
    %v361 = vmul.f32 %v267, %v360
    %v362 = vmul.f32 %v350, 3.8918573e-05
    %v363 = vadd.f32 %v362, 0.001143296
    %v364 = vmul.f32 %v350, %v363
    %v365 = vadd.f32 %v364, 0.014752088
    %v366 = vmul.f32 %v350, %v365
    %v367 = vadd.f32 %v366, 0.112945676
    %v368 = vmul.f32 %v350, %v367
    %v369 = vadd.f32 %v368, 0.4994258
    %v370 = vmul.f32 %v350, %v369
    %v371 = vadd.f32 %v370, 1.0
    %v372 = vrcp.pop %v371
    %v373 = vmul.f32 %v371, %v372
    %v374 = vsub.f32 1.0, %v373
    %v375 = vmul.f32 %v372, %v374
    %v376 = vadd.f32 %v372, %v375
    %vm377 = vweird.f32 %v371
    %vm378 = vweird.f32 %v372
    %vm379 = vmor %vm377, %vm378
    %v380 = vsel %vm379, %v372, %v376
    %v381 = vand.u32 2147483647, %v371
    %vm382 = vcmp.eq.f32.partialorder %v381, 8.507059e+37
    %v383 = vand.u32 %v371, 2147483648
    %v384 = vor.u32 1.1754944e-38, %v383
    %v385 = vsel %vm382, %v384, %v380
    %v386 = vmul.f32 %v361, %v385
    %v387 = vmin.f32 %v386, 1.0
    %v388 = vmax.f32 %v387, -1.0
    %v389 = vmul.f32 %v268, %v268
    %v390 = vmin.f32 16.0, %v389
    %v391 = vmul.f32 %v390, 2.1237322e-06
    %v392 = vadd.f32 %v391, 0.00028619796
    %v393 = vmul.f32 %v390, %v392
    %v394 = vadd.f32 %v393, 0.0036580483
    %v395 = vmul.f32 %v390, %v394
    %v396 = vadd.f32 %v395, 0.05243302
    %v397 = vmul.f32 %v390, %v396
    %v398 = vadd.f32 %v397, 0.18741608
    %v399 = vmul.f32 %v390, %v398
    %v400 = vadd.f32 %v399, 1.1283791
    %v401 = vmul.f32 %v268, %v400
    %v402 = vmul.f32 %v390, 3.8918573e-05
    %v403 = vadd.f32 %v402, 0.001143296
    %v404 = vmul.f32 %v390, %v403
    %v405 = vadd.f32 %v404, 0.014752088
    %v406 = vmul.f32 %v390, %v405
    %v407 = vadd.f32 %v406, 0.112945676
    %v408 = vmul.f32 %v390, %v407
    %v409 = vadd.f32 %v408, 0.4994258
    %v410 = vmul.f32 %v390, %v409
    %v411 = vadd.f32 %v410, 1.0
    %v412 = vrcp.pop %v411
    %v413 = vmul.f32 %v411, %v412
    %v414 = vsub.f32 1.0, %v413
    %v415 = vmul.f32 %v412, %v414
    %v416 = vadd.f32 %v412, %v415
    %vm417 = vweird.f32 %v411
    %vm418 = vweird.f32 %v412
    %vm419 = vmor %vm417, %vm418
    %v420 = vsel %vm419, %v412, %v416
    %v421 = vand.u32 2147483647, %v411
    %vm422 = vcmp.eq.f32.partialorder %v421, 8.507059e+37
    %v423 = vand.u32 %v411, 2147483648
    %v424 = vor.u32 1.1754944e-38, %v423
    %v425 = vsel %vm422, %v424, %v420
    %v426 = vmul.f32 %v401, %v425
    %v427 = vmin.f32 %v426, 1.0
    %v428 = vmax.f32 %v427, -1.0
    %v429 = vadd.f32 %v308, 1.0
    %v430 = vadd.f32 %v348, 1.0
    %v431 = vadd.f32 %v388, 1.0
    %v432 = vadd.f32 %v428, 1.0
    %v433 = vmul.f32 %v261, %v429
    %v434 = vmul.f32 %v262, %v430
    %v435 = vmul.f32 %v263, %v431
    %v436 = vmul.f32 %v264, %v432
    %v437 = vadd.f32 %v433, %v434
    %438 = vadd.xlane.f32.xlu0 %v437
    %v439 = vpop.xlane.xlu0 %438
    %v440 = vadd.f32 %v435, %v436
    %441 = vadd.xlane.f32.xlu0 %v440
    %v442 = vpop.xlane.xlu0 %441
    %v443 = vmul.f32 %v433, %v433
    %v444 = vmul.f32 %v434, %v434
    %v445 = vmul.f32 %v435, %v435
    %v446 = vmul.f32 %v436, %v436
    %v447 = vadd.f32 %v443, %v444
    %448 = vadd.xlane.f32.xlu0 %v447
    %v449 = vpop.xlane.xlu0 %448
    %v450 = vadd.f32 %v445, %v446
    %451 = vadd.xlane.f32.xlu0 %v450
    %v452 = vpop.xlane.xlu0 %451
    %v453 = vmul.f32 %v439, 0.00390625
    %v454 = vmul.f32 %v442, 0.00390625
    %v455 = vmul.f32 %v449, 0.00390625
    %v456 = vmul.f32 %v452, 0.00390625
    %v457 = vmul.f32 %v453, %v453
    %v458 = vmul.f32 %v454, %v454
    %v459 = vsub.f32 %v455, %v457
    %v460 = vsub.f32 %v456, %v458
    %v461 = vmax.f32 %v459, 0.0
    %v462 = vmax.f32 %v460, 0.0
    %v463 = vsub.f32 %v433, %v453
    %v464 = vsub.f32 %v434, %v453
    %v465 = vsub.f32 %v435, %v454
    %v466 = vsub.f32 %v436, %v454
    %v467 = vadd.f32 %v461, 1e-12
    %v468 = vadd.f32 %v462, 1e-12
    %v469 = vrsqrt.pop %v467
    %v470 = vmul.f32 %v469, %v467
    %v471 = vmul.f32 %v470, %v469
    %v472 = vmul.f32 0.5, %v471
    %v473 = vsub.f32 1.5, %v472
    %v474 = vmul.f32 %v469, %v473
    %vm475 = vweird.f32 %v467
    %vm476 = vweird.f32 %v469
    %vm477 = vmor %vm475, %vm476
    %v478 = vsel %vm477, %v469, %v474
    %v479 = vrsqrt.pop %v468
    %v480 = vmul.f32 %v479, %v468
    %v481 = vmul.f32 %v480, %v479
    %v482 = vmul.f32 0.5, %v481
    %v483 = vsub.f32 1.5, %v482
    %v484 = vmul.f32 %v479, %v483
    %vm485 = vweird.f32 %v468
    %vm486 = vweird.f32 %v479
    %vm487 = vmor %vm485, %vm486
    %v488 = vsel %vm487, %v479, %v484
    %v489 = vmul.f32 %v463, %v478
    %v490 = vmul.f32 %v464, %v478
    %v491 = vmul.f32 %v465, %v488
    %v492 = vmul.f32 %v466, %v488
    %v493 = vld [vmem:[#allocation8] sm:$0xff]
    %v494 = vld [vmem:[#allocation8 + $0x8] sm:$0xff]
    %v495 = vld [vmem:[#allocation8 + $0x10] sm:$0xff]
    %v496 = vld [vmem:[#allocation8 + $0x18] sm:$0xff]
    %v497 = vld [vmem:[#allocation8 + $0x20] sm:$0xff]
    %v498 = vld [vmem:[#allocation8 + $0x28] sm:$0xff]
    %v499 = vld [vmem:[#allocation8 + $0x30] sm:$0xff]
    %v500 = vld [vmem:[#allocation8 + $0x38] sm:$0xff]
    %v501 = vld [vmem:[#allocation8 + $0x40] sm:$0xff]
    %v502 = vld [vmem:[#allocation8 + $0x48] sm:$0xff]
    %v503 = vld [vmem:[#allocation8 + $0x50] sm:$0xff]
    %v504 = vld [vmem:[#allocation8 + $0x58] sm:$0xff]
    %v505 = vld [vmem:[#allocation8 + $0x60] sm:$0xff]
    %v506 = vld [vmem:[#allocation8 + $0x68] sm:$0xff]
    %v507 = vld [vmem:[#allocation8 + $0x70] sm:$0xff]
    %v508 = vld [vmem:[#allocation8 + $0x78] sm:$0xff]
    %v509 = vld [vmem:[#allocation8 + $0x80] sm:$0xff]
    %v510 = vld [vmem:[#allocation8 + $0x88] sm:$0xff]
    %v511 = vld [vmem:[#allocation8 + $0x90] sm:$0xff]
    %v512 = vld [vmem:[#allocation8 + $0x98] sm:$0xff]
    %v513 = vld [vmem:[#allocation8 + $0xa0] sm:$0xff]
    %v514 = vld [vmem:[#allocation8 + $0xa8] sm:$0xff]
    %v515 = vld [vmem:[#allocation8 + $0xb0] sm:$0xff]
    %v516 = vld [vmem:[#allocation8 + $0xb8] sm:$0xff]
    %v517 = vld [vmem:[#allocation8 + $0xc0] sm:$0xff]
    %v518 = vld [vmem:[#allocation8 + $0xc8] sm:$0xff]
    %v519 = vld [vmem:[#allocation8 + $0xd0] sm:$0xff]
    %v520 = vld [vmem:[#allocation8 + $0xd8] sm:$0xff]
    %v521 = vld [vmem:[#allocation8 + $0xe0] sm:$0xff]
    %v522 = vld [vmem:[#allocation8 + $0xe8] sm:$0xff]
    %v523 = vld [vmem:[#allocation8 + $0xf0] sm:$0xff]
    %v524 = vld [vmem:[#allocation8 + $0xf8] sm:$0xff]
    %v525 = vld [vmem:[#allocation8 + $0x100] sm:$0xff]
    %v526 = vld [vmem:[#allocation8 + $0x108] sm:$0xff]
    %v527 = vld [vmem:[#allocation8 + $0x110] sm:$0xff]
    %v528 = vld [vmem:[#allocation8 + $0x118] sm:$0xff]
    %v529 = vld [vmem:[#allocation8 + $0x120] sm:$0xff]
    %v530 = vld [vmem:[#allocation8 + $0x128] sm:$0xff]
    %v531 = vld [vmem:[#allocation8 + $0x130] sm:$0xff]
    %v532 = vld [vmem:[#allocation8 + $0x138] sm:$0xff]
    %v533 = vld [vmem:[#allocation8 + $0x140] sm:$0xff]
    %v534 = vld [vmem:[#allocation8 + $0x148] sm:$0xff]
    %v535 = vld [vmem:[#allocation8 + $0x150] sm:$0xff]
    %v536 = vld [vmem:[#allocation8 + $0x158] sm:$0xff]
    %v537 = vld [vmem:[#allocation8 + $0x160] sm:$0xff]
    %v538 = vld [vmem:[#allocation8 + $0x168] sm:$0xff]
    %v539 = vld [vmem:[#allocation8 + $0x170] sm:$0xff]
    %v540 = vld [vmem:[#allocation8 + $0x178] sm:$0xff]
    %v541 = vld [vmem:[#allocation8 + $0x180] sm:$0xff]
    %v542 = vld [vmem:[#allocation8 + $0x188] sm:$0xff]
    %v543 = vld [vmem:[#allocation8 + $0x190] sm:$0xff]
    %v544 = vld [vmem:[#allocation8 + $0x198] sm:$0xff]
    %v545 = vld [vmem:[#allocation8 + $0x1a0] sm:$0xff]
    %v546 = vld [vmem:[#allocation8 + $0x1a8] sm:$0xff]
    %v547 = vld [vmem:[#allocation8 + $0x1b0] sm:$0xff]
    %v548 = vld [vmem:[#allocation8 + $0x1b8] sm:$0xff]
    %v549 = vld [vmem:[#allocation8 + $0x1c0] sm:$0xff]
    %v550 = vld [vmem:[#allocation8 + $0x1c8] sm:$0xff]
    %v551 = vld [vmem:[#allocation8 + $0x1d0] sm:$0xff]
    %v552 = vld [vmem:[#allocation8 + $0x1d8] sm:$0xff]
    %v553 = vld [vmem:[#allocation8 + $0x1e0] sm:$0xff]
    %v554 = vld [vmem:[#allocation8 + $0x1e8] sm:$0xff]
    %v555 = vld [vmem:[#allocation8 + $0x1f0] sm:$0xff]
    %v556 = vld [vmem:[#allocation8 + $0x1f8] sm:$0xff]
    %v557 = vld [vmem:[#allocation8 + $0x200] sm:$0xff]
    %v558 = vld [vmem:[#allocation8 + $0x208] sm:$0xff]
    %v559 = vld [vmem:[#allocation8 + $0x210] sm:$0xff]
    %v560 = vld [vmem:[#allocation8 + $0x218] sm:$0xff]
    %v561 = vld [vmem:[#allocation8 + $0x220] sm:$0xff]
    %v562 = vld [vmem:[#allocation8 + $0x228] sm:$0xff]
    %v563 = vld [vmem:[#allocation8 + $0x230] sm:$0xff]
    %v564 = vld [vmem:[#allocation8 + $0x238] sm:$0xff]
    %v565 = vld [vmem:[#allocation8 + $0x240] sm:$0xff]
    %v566 = vld [vmem:[#allocation8 + $0x248] sm:$0xff]
    %v567 = vld [vmem:[#allocation8 + $0x250] sm:$0xff]
    %v568 = vld [vmem:[#allocation8 + $0x258] sm:$0xff]
    %v569 = vld [vmem:[#allocation8 + $0x260] sm:$0xff]
    %v570 = vld [vmem:[#allocation8 + $0x268] sm:$0xff]
    %v571 = vld [vmem:[#allocation8 + $0x270] sm:$0xff]
    %v572 = vld [vmem:[#allocation8 + $0x278] sm:$0xff]
    %v573 = vld [vmem:[#allocation8 + $0x280] sm:$0xff]
    %v574 = vld [vmem:[#allocation8 + $0x288] sm:$0xff]
    %v575 = vld [vmem:[#allocation8 + $0x290] sm:$0xff]
    %v576 = vld [vmem:[#allocation8 + $0x298] sm:$0xff]
    %v577 = vld [vmem:[#allocation8 + $0x2a0] sm:$0xff]
    %v578 = vld [vmem:[#allocation8 + $0x2a8] sm:$0xff]
    %v579 = vld [vmem:[#allocation8 + $0x2b0] sm:$0xff]
    %v580 = vld [vmem:[#allocation8 + $0x2b8] sm:$0xff]
    %v581 = vld [vmem:[#allocation8 + $0x2c0] sm:$0xff]
    %v582 = vld [vmem:[#allocation8 + $0x2c8] sm:$0xff]
    %v583 = vld [vmem:[#allocation8 + $0x2d0] sm:$0xff]
    %v584 = vld [vmem:[#allocation8 + $0x2d8] sm:$0xff]
    %v585 = vld [vmem:[#allocation8 + $0x2e0] sm:$0xff]
    %v586 = vld [vmem:[#allocation8 + $0x2e8] sm:$0xff]
    %v587 = vld [vmem:[#allocation8 + $0x2f0] sm:$0xff]
    %v588 = vld [vmem:[#allocation8 + $0x2f8] sm:$0xff]
    %v589 = vld [vmem:[#allocation8 + $0x300] sm:$0xff]
    %v590 = vld [vmem:[#allocation8 + $0x308] sm:$0xff]
    %v591 = vld [vmem:[#allocation8 + $0x310] sm:$0xff]
    %v592 = vld [vmem:[#allocation8 + $0x318] sm:$0xff]
    %v593 = vld [vmem:[#allocation8 + $0x320] sm:$0xff]
    %v594 = vld [vmem:[#allocation8 + $0x328] sm:$0xff]
    %v595 = vld [vmem:[#allocation8 + $0x330] sm:$0xff]
    %v596 = vld [vmem:[#allocation8 + $0x338] sm:$0xff]
    %v597 = vld [vmem:[#allocation8 + $0x340] sm:$0xff]
    %v598 = vld [vmem:[#allocation8 + $0x348] sm:$0xff]
    %v599 = vld [vmem:[#allocation8 + $0x350] sm:$0xff]
    %v600 = vld [vmem:[#allocation8 + $0x358] sm:$0xff]
    %v601 = vld [vmem:[#allocation8 + $0x360] sm:$0xff]
    %v602 = vld [vmem:[#allocation8 + $0x368] sm:$0xff]
    %v603 = vld [vmem:[#allocation8 + $0x370] sm:$0xff]
    %v604 = vld [vmem:[#allocation8 + $0x378] sm:$0xff]
    %v605 = vld [vmem:[#allocation8 + $0x380] sm:$0xff]
    %v606 = vld [vmem:[#allocation8 + $0x388] sm:$0xff]
    %v607 = vld [vmem:[#allocation8 + $0x390] sm:$0xff]
    %v608 = vld [vmem:[#allocation8 + $0x398] sm:$0xff]
    %v609 = vld [vmem:[#allocation8 + $0x3a0] sm:$0xff]
    %v610 = vld [vmem:[#allocation8 + $0x3a8] sm:$0xff]
    %v611 = vld [vmem:[#allocation8 + $0x3b0] sm:$0xff]
    %v612 = vld [vmem:[#allocation8 + $0x3b8] sm:$0xff]
    %v613 = vld [vmem:[#allocation8 + $0x3c0] sm:$0xff]
    %v614 = vld [vmem:[#allocation8 + $0x3c8] sm:$0xff]
    %v615 = vld [vmem:[#allocation8 + $0x3d0] sm:$0xff]
    %v616 = vld [vmem:[#allocation8 + $0x3d8] sm:$0xff]
    %v617 = vld [vmem:[#allocation8 + $0x3e0] sm:$0xff]
    %v618 = vld [vmem:[#allocation8 + $0x3e8] sm:$0xff]
    %v619 = vld [vmem:[#allocation8 + $0x3f0] sm:$0xff]
    %v620 = vld [vmem:[#allocation8 + $0x3f8] sm:$0xff]
    %v621 = vld [vmem:[#allocation8 + $0x400] sm:$0xff]
    %v622 = vld [vmem:[#allocation8 + $0x408] sm:$0xff]
    %v623 = vld [vmem:[#allocation8 + $0x410] sm:$0xff]
    %v624 = vld [vmem:[#allocation8 + $0x418] sm:$0xff]
    %v625 = vld [vmem:[#allocation8 + $0x420] sm:$0xff]
    %v626 = vld [vmem:[#allocation8 + $0x428] sm:$0xff]
    %v627 = vld [vmem:[#allocation8 + $0x430] sm:$0xff]
    %v628 = vld [vmem:[#allocation8 + $0x438] sm:$0xff]
    %v629 = vld [vmem:[#allocation8 + $0x440] sm:$0xff]
    %v630 = vld [vmem:[#allocation8 + $0x448] sm:$0xff]
    %v631 = vld [vmem:[#allocation8 + $0x450] sm:$0xff]
    %v632 = vld [vmem:[#allocation8 + $0x458] sm:$0xff]
    %v633 = vld [vmem:[#allocation8 + $0x460] sm:$0xff]
    %v634 = vld [vmem:[#allocation8 + $0x468] sm:$0xff]
    %v635 = vld [vmem:[#allocation8 + $0x470] sm:$0xff]
    %v636 = vld [vmem:[#allocation8 + $0x478] sm:$0xff]
    %v637 = vld [vmem:[#allocation8 + $0x480] sm:$0xff]
    %v638 = vld [vmem:[#allocation8 + $0x488] sm:$0xff]
    %v639 = vld [vmem:[#allocation8 + $0x490] sm:$0xff]
    %v640 = vld [vmem:[#allocation8 + $0x498] sm:$0xff]
    %v641 = vld [vmem:[#allocation8 + $0x4a0] sm:$0xff]
    %v642 = vld [vmem:[#allocation8 + $0x4a8] sm:$0xff]
    %v643 = vld [vmem:[#allocation8 + $0x4b0] sm:$0xff]
    %v644 = vld [vmem:[#allocation8 + $0x4b8] sm:$0xff]
    %v645 = vld [vmem:[#allocation8 + $0x4c0] sm:$0xff]
    %v646 = vld [vmem:[#allocation8 + $0x4c8] sm:$0xff]
    %v647 = vld [vmem:[#allocation8 + $0x4d0] sm:$0xff]
    %v648 = vld [vmem:[#allocation8 + $0x4d8] sm:$0xff]
    %v649 = vld [vmem:[#allocation8 + $0x4e0] sm:$0xff]
    %v650 = vld [vmem:[#allocation8 + $0x4e8] sm:$0xff]
    %v651 = vld [vmem:[#allocation8 + $0x4f0] sm:$0xff]
    %v652 = vld [vmem:[#allocation8 + $0x4f8] sm:$0xff]
    %v653 = vld [vmem:[#allocation8 + $0x500] sm:$0xff]
    %v654 = vld [vmem:[#allocation8 + $0x508] sm:$0xff]
    %v655 = vld [vmem:[#allocation8 + $0x510] sm:$0xff]
    %v656 = vld [vmem:[#allocation8 + $0x518] sm:$0xff]
    %v657 = vld [vmem:[#allocation8 + $0x520] sm:$0xff]
    %v658 = vld [vmem:[#allocation8 + $0x528] sm:$0xff]
    %v659 = vld [vmem:[#allocation8 + $0x530] sm:$0xff]
    %v660 = vld [vmem:[#allocation8 + $0x538] sm:$0xff]
    %v661 = vld [vmem:[#allocation8 + $0x540] sm:$0xff]
    %v662 = vld [vmem:[#allocation8 + $0x548] sm:$0xff]
    %v663 = vld [vmem:[#allocation8 + $0x550] sm:$0xff]
    %v664 = vld [vmem:[#allocation8 + $0x558] sm:$0xff]
    %v665 = vld [vmem:[#allocation8 + $0x560] sm:$0xff]
    %v666 = vld [vmem:[#allocation8 + $0x568] sm:$0xff]
    %v667 = vld [vmem:[#allocation8 + $0x570] sm:$0xff]
    %v668 = vld [vmem:[#allocation8 + $0x578] sm:$0xff]
    %v669 = vld [vmem:[#allocation8 + $0x580] sm:$0xff]
    %v670 = vld [vmem:[#allocation8 + $0x588] sm:$0xff]
    %v671 = vld [vmem:[#allocation8 + $0x590] sm:$0xff]
    %v672 = vld [vmem:[#allocation8 + $0x598] sm:$0xff]
    %v673 = vld [vmem:[#allocation8 + $0x5a0] sm:$0xff]
    %v674 = vld [vmem:[#allocation8 + $0x5a8] sm:$0xff]
    %v675 = vld [vmem:[#allocation8 + $0x5b0] sm:$0xff]
    %v676 = vld [vmem:[#allocation8 + $0x5b8] sm:$0xff]
    %v677 = vld [vmem:[#allocation8 + $0x5c0] sm:$0xff]
    %v678 = vld [vmem:[#allocation8 + $0x5c8] sm:$0xff]
    %v679 = vld [vmem:[#allocation8 + $0x5d0] sm:$0xff]
    %v680 = vld [vmem:[#allocation8 + $0x5d8] sm:$0xff]
    %v681 = vld [vmem:[#allocation8 + $0x5e0] sm:$0xff]
    %v682 = vld [vmem:[#allocation8 + $0x5e8] sm:$0xff]
    %v683 = vld [vmem:[#allocation8 + $0x5f0] sm:$0xff]
    %v684 = vld [vmem:[#allocation8 + $0x5f8] sm:$0xff]
    %v685 = vld [vmem:[#allocation10] sm:$0x3f]
    %v687 = vperm.slane %v685, 0
    %v688 = vperm.slane %v685, 1
    %v689 = vperm.slane %v685, 2
    %v690 = vperm.slane %v685, 3
    %v691 = vperm.slane %v685, 4
    %v692 = vperm.slane %v685, 5
    %699 = vmatpush.msra.mxu0 %v583
    %700 = vmatpush.msra.mxu0 %v577
    %701 = vmatpush.msra.mxu0 %v571
    %702 = vmatpush.msra.mxu0 %v565
    %703 = vmatpush.msra.mxu0 %v559
    %704 = vmatpush.msra.mxu0 %v553
    %705 = vmatpush.msra.mxu0 %v547
    %706 = vmatpush.msra.mxu0 %v541
    %707 = vmatpush.msra.mxu0 %v535
    %708 = vmatpush.msra.mxu0 %v529
    %709 = vmatpush.msra.mxu0 %v523
    %710 = vmatpush.msra.mxu0 %v517
    %711 = vmatpush.msra.mxu0 %v511
    %712 = vmatpush.msra.mxu0 %v505
    %713 = vmatpush.msra.mxu0 %v499
    %714 = vmatpush.msra.mxu0 %v493
    %715 = vmatmul.f32.gmra.mxu0 %v489
    %v716 = vpop.f32.mrf.mxu0
    %v717 = vadd.f32 %v687, %v716
    %718 = vmatmul.f32.gmra.mxu0 %v491
    %v719 = vpop.f32.mrf.mxu0
    %v720 = vadd.f32 %v687, %v719
    %721 = vdwg.mxu0
    %722 = vmatpush.msra.mxu0 %v679
    %723 = vmatpush.msra.mxu0 %v673
    %724 = vmatpush.msra.mxu0 %v667
    %725 = vmatpush.msra.mxu0 %v661
    %726 = vmatpush.msra.mxu0 %v655
    %727 = vmatpush.msra.mxu0 %v649
    %728 = vmatpush.msra.mxu0 %v643
    %729 = vmatpush.msra.mxu0 %v637
    %730 = vmatpush.msra.mxu0 %v631
    %731 = vmatpush.msra.mxu0 %v625
    %732 = vmatpush.msra.mxu0 %v619
    %733 = vmatpush.msra.mxu0 %v613
    %734 = vmatpush.msra.mxu0 %v607
    %735 = vmatpush.msra.mxu0 %v601
    %736 = vmatpush.msra.mxu0 %v595
    %737 = vmatpush.msra.mxu0 %v589
    %738 = vmatmul.f32.gmra.mxu0 %v490
    %v739 = vpop.f32.mrf.mxu0
    %v740 = vadd.f32 %v717, %v739
    %741 = vmatmul.f32.gmra.mxu0 %v492
    %v742 = vpop.f32.mrf.mxu0
    %v743 = vadd.f32 %v720, %v742
    %744 = vdwg.mxu0
    %745 = vmatpush.msra.mxu0 %v584
    %746 = vmatpush.msra.mxu0 %v578
    %747 = vmatpush.msra.mxu0 %v572
    %748 = vmatpush.msra.mxu0 %v566
    %749 = vmatpush.msra.mxu0 %v560
    %750 = vmatpush.msra.mxu0 %v554
    %751 = vmatpush.msra.mxu0 %v548
    %752 = vmatpush.msra.mxu0 %v542
    %753 = vmatpush.msra.mxu0 %v536
    %754 = vmatpush.msra.mxu0 %v530
    %755 = vmatpush.msra.mxu0 %v524
    %756 = vmatpush.msra.mxu0 %v518
    %757 = vmatpush.msra.mxu0 %v512
    %758 = vmatpush.msra.mxu0 %v506
    %759 = vmatpush.msra.mxu0 %v500
    %760 = vmatpush.msra.mxu0 %v494
    %761 = vmatmul.f32.gmra.mxu0 %v489
    %v762 = vpop.f32.mrf.mxu0
    %v763 = vadd.f32 %v688, %v762
    %764 = vmatmul.f32.gmra.mxu0 %v491
    %v765 = vpop.f32.mrf.mxu0
    %v766 = vadd.f32 %v688, %v765
    %767 = vdwg.mxu0
    %768 = vmatpush.msra.mxu0 %v680
    %769 = vmatpush.msra.mxu0 %v674
    %770 = vmatpush.msra.mxu0 %v668
    %771 = vmatpush.msra.mxu0 %v662
    %772 = vmatpush.msra.mxu0 %v656
    %773 = vmatpush.msra.mxu0 %v650
    %774 = vmatpush.msra.mxu0 %v644
    %775 = vmatpush.msra.mxu0 %v638
    %776 = vmatpush.msra.mxu0 %v632
    %777 = vmatpush.msra.mxu0 %v626
    %778 = vmatpush.msra.mxu0 %v620
    %779 = vmatpush.msra.mxu0 %v614
    %780 = vmatpush.msra.mxu0 %v608
    %781 = vmatpush.msra.mxu0 %v602
    %782 = vmatpush.msra.mxu0 %v596
    %783 = vmatpush.msra.mxu0 %v590
    %784 = vmatmul.f32.gmra.mxu0 %v490
    %v785 = vpop.f32.mrf.mxu0
    %v786 = vadd.f32 %v763, %v785
    %787 = vmatmul.f32.gmra.mxu0 %v492
    %v788 = vpop.f32.mrf.mxu0
    %v789 = vadd.f32 %v766, %v788
    %790 = vdwg.mxu0
    %791 = vmatpush.msra.mxu0 %v585
    %792 = vmatpush.msra.mxu0 %v579
    %793 = vmatpush.msra.mxu0 %v573
    %794 = vmatpush.msra.mxu0 %v567
    %795 = vmatpush.msra.mxu0 %v561
    %796 = vmatpush.msra.mxu0 %v555
    %797 = vmatpush.msra.mxu0 %v549
    %798 = vmatpush.msra.mxu0 %v543
    %799 = vmatpush.msra.mxu0 %v537
    %800 = vmatpush.msra.mxu0 %v531
    %801 = vmatpush.msra.mxu0 %v525
    %802 = vmatpush.msra.mxu0 %v519
    %803 = vmatpush.msra.mxu0 %v513
    %804 = vmatpush.msra.mxu0 %v507
    %805 = vmatpush.msra.mxu0 %v501
    %806 = vmatpush.msra.mxu0 %v495
    %807 = vmatmul.f32.gmra.mxu0 %v489
    %v808 = vpop.f32.mrf.mxu0
    %v809 = vadd.f32 %v689, %v808
    %810 = vmatmul.f32.gmra.mxu0 %v491
    %v811 = vpop.f32.mrf.mxu0
    %v812 = vadd.f32 %v689, %v811
    %813 = vdwg.mxu0
    %814 = vmatpush.msra.mxu0 %v681
    %815 = vmatpush.msra.mxu0 %v675
    %816 = vmatpush.msra.mxu0 %v669
    %817 = vmatpush.msra.mxu0 %v663
    %818 = vmatpush.msra.mxu0 %v657
    %819 = vmatpush.msra.mxu0 %v651
    %820 = vmatpush.msra.mxu0 %v645
    %821 = vmatpush.msra.mxu0 %v639
    %822 = vmatpush.msra.mxu0 %v633
    %823 = vmatpush.msra.mxu0 %v627
    %824 = vmatpush.msra.mxu0 %v621
    %825 = vmatpush.msra.mxu0 %v615
    %826 = vmatpush.msra.mxu0 %v609
    %827 = vmatpush.msra.mxu0 %v603
    %828 = vmatpush.msra.mxu0 %v597
    %829 = vmatpush.msra.mxu0 %v591
    %830 = vmatmul.f32.gmra.mxu0 %v490
    %v831 = vpop.f32.mrf.mxu0
    %v832 = vadd.f32 %v809, %v831
    %833 = vmatmul.f32.gmra.mxu0 %v492
    %v834 = vpop.f32.mrf.mxu0
    %v835 = vadd.f32 %v812, %v834
    %836 = vdwg.mxu0
    %837 = vmatpush.msra.mxu0 %v586
    %838 = vmatpush.msra.mxu0 %v580
    %839 = vmatpush.msra.mxu0 %v574
    %840 = vmatpush.msra.mxu0 %v568
    %841 = vmatpush.msra.mxu0 %v562
    %842 = vmatpush.msra.mxu0 %v556
    %843 = vmatpush.msra.mxu0 %v550
    %844 = vmatpush.msra.mxu0 %v544
    %845 = vmatpush.msra.mxu0 %v538
    %846 = vmatpush.msra.mxu0 %v532
    %847 = vmatpush.msra.mxu0 %v526
    %848 = vmatpush.msra.mxu0 %v520
    %849 = vmatpush.msra.mxu0 %v514
    %850 = vmatpush.msra.mxu0 %v508
    %851 = vmatpush.msra.mxu0 %v502
    %852 = vmatpush.msra.mxu0 %v496
    %853 = vmatmul.f32.gmra.mxu0 %v489
    %v854 = vpop.f32.mrf.mxu0
    %v855 = vadd.f32 %v690, %v854
    %856 = vmatmul.f32.gmra.mxu0 %v491
    %v857 = vpop.f32.mrf.mxu0
    %v858 = vadd.f32 %v690, %v857
    %859 = vdwg.mxu0
    %860 = vmatpush.msra.mxu0 %v682
    %861 = vmatpush.msra.mxu0 %v676
    %862 = vmatpush.msra.mxu0 %v670
    %863 = vmatpush.msra.mxu0 %v664
    %864 = vmatpush.msra.mxu0 %v658
    %865 = vmatpush.msra.mxu0 %v652
    %866 = vmatpush.msra.mxu0 %v646
    %867 = vmatpush.msra.mxu0 %v640
    %868 = vmatpush.msra.mxu0 %v634
    %869 = vmatpush.msra.mxu0 %v628
    %870 = vmatpush.msra.mxu0 %v622
    %871 = vmatpush.msra.mxu0 %v616
    %872 = vmatpush.msra.mxu0 %v610
    %873 = vmatpush.msra.mxu0 %v604
    %874 = vmatpush.msra.mxu0 %v598
    %875 = vmatpush.msra.mxu0 %v592
    %876 = vmatmul.f32.gmra.mxu0 %v490
    %v877 = vpop.f32.mrf.mxu0
    %v878 = vadd.f32 %v855, %v877
    %879 = vmatmul.f32.gmra.mxu0 %v492
    %v880 = vpop.f32.mrf.mxu0
    %v881 = vadd.f32 %v858, %v880
    %882 = vdwg.mxu0
    %883 = vmatpush.msra.mxu0 %v587
    %884 = vmatpush.msra.mxu0 %v581
    %885 = vmatpush.msra.mxu0 %v575
    %886 = vmatpush.msra.mxu0 %v569
    %887 = vmatpush.msra.mxu0 %v563
    %888 = vmatpush.msra.mxu0 %v557
    %889 = vmatpush.msra.mxu0 %v551
    %890 = vmatpush.msra.mxu0 %v545
    %891 = vmatpush.msra.mxu0 %v539
    %892 = vmatpush.msra.mxu0 %v533
    %893 = vmatpush.msra.mxu0 %v527
    %894 = vmatpush.msra.mxu0 %v521
    %895 = vmatpush.msra.mxu0 %v515
    %896 = vmatpush.msra.mxu0 %v509
    %897 = vmatpush.msra.mxu0 %v503
    %898 = vmatpush.msra.mxu0 %v497
    %899 = vmatmul.f32.gmra.mxu0 %v489
    %v900 = vpop.f32.mrf.mxu0
    %v901 = vadd.f32 %v691, %v900
    %902 = vmatmul.f32.gmra.mxu0 %v491
    %v903 = vpop.f32.mrf.mxu0
    %v904 = vadd.f32 %v691, %v903
    %905 = vdwg.mxu0
    %906 = vmatpush.msra.mxu0 %v683
    %907 = vmatpush.msra.mxu0 %v677
    %908 = vmatpush.msra.mxu0 %v671
    %909 = vmatpush.msra.mxu0 %v665
    %910 = vmatpush.msra.mxu0 %v659
    %911 = vmatpush.msra.mxu0 %v653
    %912 = vmatpush.msra.mxu0 %v647
    %913 = vmatpush.msra.mxu0 %v641
    %914 = vmatpush.msra.mxu0 %v635
    %915 = vmatpush.msra.mxu0 %v629
    %916 = vmatpush.msra.mxu0 %v623
    %917 = vmatpush.msra.mxu0 %v617
    %918 = vmatpush.msra.mxu0 %v611
    %919 = vmatpush.msra.mxu0 %v605
    %920 = vmatpush.msra.mxu0 %v599
    %921 = vmatpush.msra.mxu0 %v593
    %922 = vmatmul.f32.gmra.mxu0 %v490
    %v923 = vpop.f32.mrf.mxu0
    %v924 = vadd.f32 %v901, %v923
    %925 = vmatmul.f32.gmra.mxu0 %v492
    %v926 = vpop.f32.mrf.mxu0
    %v927 = vadd.f32 %v904, %v926
    %928 = vdwg.mxu0
    %929 = vmatpush.msra.mxu0 %v588
    %930 = vmatpush.msra.mxu0 %v582
    %931 = vmatpush.msra.mxu0 %v576
    %932 = vmatpush.msra.mxu0 %v570
    %933 = vmatpush.msra.mxu0 %v564
    %934 = vmatpush.msra.mxu0 %v558
    %935 = vmatpush.msra.mxu0 %v552
    %936 = vmatpush.msra.mxu0 %v546
    %937 = vmatpush.msra.mxu0 %v540
    %938 = vmatpush.msra.mxu0 %v534
    %939 = vmatpush.msra.mxu0 %v528
    %940 = vmatpush.msra.mxu0 %v522
    %941 = vmatpush.msra.mxu0 %v516
    %942 = vmatpush.msra.mxu0 %v510
    %943 = vmatpush.msra.mxu0 %v504
    %944 = vmatpush.msra.mxu0 %v498
    %945 = vmatmul.f32.gmra.mxu0 %v489
    %v946 = vpop.f32.mrf.mxu0
    %v947 = vadd.f32 %v692, %v946
    %948 = vmatmul.f32.gmra.mxu0 %v491
    %v949 = vpop.f32.mrf.mxu0
    %v950 = vadd.f32 %v692, %v949
    %951 = vdwg.mxu0
    %952 = vmatpush.msra.mxu0 %v684
    %953 = vmatpush.msra.mxu0 %v678
    %954 = vmatpush.msra.mxu0 %v672
    %955 = vmatpush.msra.mxu0 %v666
    %956 = vmatpush.msra.mxu0 %v660
    %957 = vmatpush.msra.mxu0 %v654
    %958 = vmatpush.msra.mxu0 %v648
    %959 = vmatpush.msra.mxu0 %v642
    %960 = vmatpush.msra.mxu0 %v636
    %961 = vmatpush.msra.mxu0 %v630
    %962 = vmatpush.msra.mxu0 %v624
    %963 = vmatpush.msra.mxu0 %v618
    %964 = vmatpush.msra.mxu0 %v612
    %965 = vmatpush.msra.mxu0 %v606
    %966 = vmatpush.msra.mxu0 %v600
    %967 = vmatpush.msra.mxu0 %v594
    %968 = vmatmul.f32.gmra.mxu0 %v490
    %v969 = vpop.f32.mrf.mxu0
    %v970 = vadd.f32 %v947, %v969
    %971 = vmatmul.f32.gmra.mxu0 %v492
    %v972 = vpop.f32.mrf.mxu0
    %v973 = vadd.f32 %v950, %v972
    %974 = vdwg.mxu0
    %975 = vst [vmem:[#allocation11] sm:$0xff] %v740
    %976 = vst [vmem:[#allocation11 + $0x8] sm:$0xff] %v786
    %977 = vst [vmem:[#allocation11 + $0x10] sm:$0xff] %v832
    %978 = vst [vmem:[#allocation11 + $0x18] sm:$0xff] %v878
    %979 = vst [vmem:[#allocation11 + $0x20] sm:$0xff] %v924
    %980 = vst [vmem:[#allocation11 + $0x28] sm:$0xff] %v970
    %981 = vst [vmem:[#allocation11 + $0x30] sm:$0xff] %v743
    %982 = vst [vmem:[#allocation11 + $0x38] sm:$0xff] %v789
    %983 = vst [vmem:[#allocation11 + $0x40] sm:$0xff] %v835
    %984 = vst [vmem:[#allocation11 + $0x48] sm:$0xff] %v881
    %985 = vst [vmem:[#allocation11 + $0x50] sm:$0xff] %v927
    %986 = vst [vmem:[#allocation11 + $0x58] sm:$0xff] %v973
    // Predicated region
    $region42: #{tpu_custom_call.1} parent=1 // pred_check
      _
    $region43: #{tpu_custom_call.1} parent=1 // pred_check_branch
      %988 = sbr.rel (0) target = $region45
    $region44: #{tpu_custom_call.1} parent=1 // pred_region
      %990 = vsyncadd [#allocation4], 0
      %s991 = sshll.u32 [#allocation11], 4
      %s992 = int_to_ptr.vmem [resolvable:$true] %s991
      %s993 = sshll.u32 %s5, 4
      %s994 = int_to_ptr.hbm [resolvable:$true] %s993
      %999 = dma.vmem_to_hbm [thread:$0]  %s992, 1536, %s994, [#allocation4], 768, 768, 48
    $region45: #{tpu_custom_call.1} parent=1 // pred_fallthru
      _
    // Predicated region
    $region46: #{tpu_custom_call.1} parent=1 // pred_check
      _
    $region47: #{tpu_custom_call.1} parent=1 // pred_check_branch
      %1001 = sbr.rel (0) target = $region49
    $region48: #{tpu_custom_call.1} parent=1 // pred_region
      %1003 = dma.done [#allocation4], 1536
    $region49: #{tpu_custom_call.1} parent=1 // pred_fallthru
      _
    %1004 = vsyncpa [#allocation3], 1
    %1005 = vsyncpa [#allocation6], 1
    %1006 = vsyncpa [#allocation9], 1
    %1007 = vsyncpa [#allocation4], 1

</llo_original>
